<compile_context>
chip_gen: v7x
topology: tpu7x:2x2x1
jax: 0.10.0
libtpu: 0.0.40
codegen_flags: <defaults>
</compile_context>

<pallas_src>
import jax
import jax.numpy as jnp
from jax.experimental import pallas as pl
from jax.experimental.pallas import tpu as pltpu


def _cdiv(a, b):
    return -(-a // b)


def _round_up(a, m):
    return ((a + m - 1) // m) * m


def _vmem_capacity_bytes():
    """Physical VMEM per TensorCore; conservative fallback if unavailable."""
    try:
        get_info = getattr(pltpu, "get_tpu_info", None)
        if get_info is not None:
            cap = getattr(get_info(), "vmem_capacity_bytes", None)
            if cap:
                return int(cap)
    except Exception:
        pass
    return 64 * 1024 * 1024   # v7x floor -> conservative tiling everywhere


def pa_layer_pallas(x_nchw, w1, b1, w2, b2, *, tile_hw=None):
    """Pixel attention.

    x_nchw: (N, C, H, W).  w1: (C, C//8), b1: (C//8,), w2: (C//8, 1), b2: (1,).
    Returns (N, C, H, W), same dtype as x.
    """
    N, C, H, W = x_nchw.shape
    hidden = w1.shape[1]
    HW = H * W
    itemsize = jnp.dtype(x_nchw.dtype).itemsize

    # ---- per-generation tile / VMEM budget ---------------------------------
    vmem_cap = _vmem_capacity_bytes()
    small_vmem = vmem_cap < 100 * 1024 * 1024            # v7x: 64 MiB per TC
    tile_budget = (4 if small_vmem else 8) * 1024 * 1024  # bytes per x tile
    vmem_limit_cap = (32 if small_vmem else 64) * 1024 * 1024

    max_tile_px = max(128, (tile_budget // (C * itemsize)) // 128 * 128)
    t = min(max_tile_px, _round_up(HW, 128))
    if tile_hw is not None:
        t = min(t, max(128, _round_up(tile_hw, 128)))
    t = max(128, t)

    # On the 2-TC parts keep >= ~4 grid steps so both TensorCores get work.
    if small_vmem:
        while N * _cdiv(HW, t) < 4 and t > 1024:
            t = max(1024, (t // 2) // 128 * 128)

    rem = HW % t                                         # ragged tail (static)
    grid = (N, _cdiv(HW, t))

    # ---- operands (no padding, no transposes: reshape is free in XLA) ------
    x3 = x_nchw.reshape(N, C, HW)
    w1t = jnp.transpose(w1).astype(x_nchw.dtype)         # (hidden, C), matches x
    b1c = b1.reshape(hidden, 1).astype(jnp.float32)      # (hidden, 1)
    w2t = jnp.transpose(w2).astype(jnp.float32)          # (1, hidden)
    b2c = b2.reshape(1, 1).astype(jnp.float32)           # (1, 1)

    # ---- kernel (closes over static C, t, rem) ------------------------------
    def kernel(x_ref, w1t_ref, b1_ref, w2t_ref, b2_ref, o_ref):
        x = x_ref[...]                                             # (C, t)
        # conv1 (1x1): contract over channels on the MXU, f32 accumulation
        h = jnp.dot(w1t_ref[...], x, preferred_element_type=jnp.float32)
        h = jnp.maximum(h + b1_ref[...], 0.0)                      # (hidden, t)
        # conv2 (1x1): single attention value per pixel, + bias, sigmoid
        y = jnp.dot(w2t_ref[...], h, preferred_element_type=jnp.float32)
        y = jax.nn.sigmoid(y + b2_ref[...])                        # (1, t) f32
        out = x * y.astype(o_ref.dtype)                            # (C, t)

        if rem == 0:
            o_ref[...] = out                      # every tile is full: plain store
        else:
            last = pl.num_programs(1) - 1
            p = pl.program_id(1)

            @pl.when(p != last)
            def _():
                o_ref[...] = out                  # full, unmasked lane-dense store

            @pl.when(p == last)
            def _():
                # Ragged tail: only the first `rem` lanes are real pixels; the
                # out-of-bounds lanes hold garbage reads, so zero them before
                # the store (Pallas writes back only the in-bounds region).
                lane = jax.lax.broadcasted_iota(jnp.int32, (C, t), 1)
                o_ref[...] = jnp.where(lane < rem, out, jnp.zeros_like(out))

    tile_bytes = C * t * itemsize
    # double-buffered in + out tiles + weights/temporaries + headroom, clamped
    # per generation (<= ~26 MiB on v7x, <= ~50 MiB on v5e/v6e)
    vmem_bytes = int(min(max(6 * tile_bytes + (2 << 20), 16 * 1024 * 1024),
                         vmem_limit_cap))

    out3 = pl.pallas_call(
        kernel,
        out_shape=jax.ShapeDtypeStruct((N, C, HW), x_nchw.dtype),
        grid_spec=pltpu.PrefetchScalarGridSpec(
            num_scalar_prefetch=0,
            grid=grid,
            in_specs=[
                pl.BlockSpec((None, C, t), lambda n, p: (n, 0, p)),   # x tile
                pl.BlockSpec((hidden, C), lambda n, p: (0, 0)),       # w1^T
                pl.BlockSpec((hidden, 1), lambda n, p: (0, 0)),       # b1
                pl.BlockSpec((1, hidden), lambda n, p: (0, 0)),       # w2^T
                pl.BlockSpec((1, 1), lambda n, p: (0, 0)),            # b2
            ],
            out_specs=pl.BlockSpec((None, C, t), lambda n, p: (n, 0, p)),
        ),
        compiler_params=pltpu.CompilerParams(
            dimension_semantics=("parallel", "parallel"),
            vmem_limit_bytes=vmem_bytes,
        ),
    )(x3, w1t, b1c, w2t, b2c)

    return out3.reshape(N, C, H, W)


def _reference(x_nchw, w1, b1, w2, b2):
    # pure-JAX reference for the same math (1x1 convs as einsums)
    h = jnp.einsum("nchw,cd->ndhw", x_nchw, w1) + b1[None, :, None, None]
    h = jnp.maximum(h, 0.0)
    y = jnp.einsum("ndhw,do->nohw", h, w2) + b2[None, :, None, None]
    y = jax.nn.sigmoid(y)  # (N, 1, H, W)
    return x_nchw * y


if __name__ == "__main__":
    key = jax.random.PRNGKey(0)
    N, C = 2, 16                      # channel must be >= 8 (hidden = channel // 8)
    hidden = C // 8

    k_x, k_w1, k_b1, k_w2, k_b2, k_x2 = jax.random.split(key, 6)

    # deterministic synthetic parameters (shapes from nn.Conv2d(C, C//8, 1) etc.)
    w1 = jax.random.normal(k_w1, (C, hidden), dtype=jnp.float32) * 0.1
    b1 = jax.random.normal(k_b1, (hidden,), dtype=jnp.float32) * 0.1
    w2 = jax.random.normal(k_w2, (hidden, 1), dtype=jnp.float32) * 0.1
    b2 = jax.random.normal(k_b2, (1,), dtype=jnp.float32) * 0.1

    # case 1: H*W a multiple of the 128-lane tile (fast, unmasked path)
    x = jax.random.normal(k_x, (N, C, 16, 16), dtype=jnp.float32)
    out = jax.block_until_ready(pa_layer_pallas(x, w1, b1, w2, b2))
    ref = _reference(x, w1, b1, w2, b2)
    assert out.shape == x.shape
    assert jnp.allclose(out, ref, atol=1e-5, rtol=1e-5), "mismatch (aligned)"

    # case 2: ragged H*W (exercises the in-kernel masked tail; no HBM pad/slice)
    x2 = jax.random.normal(k_x2, (N, C, 11, 13), dtype=jnp.float32)
    out2 = jax.block_until_ready(pa_layer_pallas(x2, w1, b1, w2, b2, tile_hw=128))
    ref2 = _reference(x2, w1, b1, w2, b2)
    assert out2.shape == x2.shape
    assert jnp.allclose(out2, ref2, atol=1e-5, rtol=1e-5), "mismatch (ragged)"

    print("KERNEL_OK")
</pallas_src>

<mosaic_0001>
module attributes {stable_mosaic.version = 11 : i64} {
  func.func @kernel(%arg0: i32, %arg1: i32, %arg2: memref<1x16x256xf32, #tpu.memory_space<vmem>>, %arg3: memref<2x16xf32, #tpu.memory_space<vmem>>, %arg4: memref<2x1xf32, #tpu.memory_space<vmem>>, %arg5: memref<1x2xf32, #tpu.memory_space<vmem>>, %arg6: memref<1x1xf32, #tpu.memory_space<vmem>>, %arg7: memref<1x16x256xf32, #tpu.memory_space<vmem>>) attributes {dimension_semantics = [#tpu.dimension_semantics<parallel>, #tpu.dimension_semantics<parallel>], iteration_bounds = array<i64: 2, 1>, scalar_prefetch = 0 : i64, scratch_operands = 0 : i64, tpu.core_type = #tpu.core_type<tc>, window_params = [{transform_indices = @transform_0, window_bounds = array<i64: 1, 16, 256>}, {pipeline_mode = #tpu.pipeline_mode<synchronous>, transform_indices = @transform_1, window_bounds = array<i64: 2, 16>}, {pipeline_mode = #tpu.pipeline_mode<synchronous>, transform_indices = @transform_2, window_bounds = array<i64: 2, 1>}, {pipeline_mode = #tpu.pipeline_mode<synchronous>, transform_indices = @transform_3, window_bounds = array<i64: 1, 2>}, {pipeline_mode = #tpu.pipeline_mode<synchronous>, transform_indices = @transform_4, window_bounds = array<i64: 1, 1>}, {transform_indices = @transform_5, window_bounds = array<i64: 1, 16, 256>}]} {
    %c0 = arith.constant 0 : index
    %c0_0 = arith.constant 0 : index
    %c0_1 = arith.constant 0 : index
    %0 = vector.load %arg2[%c0, %c0_0, %c0_1] : memref<1x16x256xf32, #tpu.memory_space<vmem>>, vector<1x16x256xf32>
    %1 = vector.shape_cast %0 : vector<1x16x256xf32> to vector<16x256xf32>
    %c0_2 = arith.constant 0 : index
    %c0_3 = arith.constant 0 : index
    %2 = vector.load %arg3[%c0_2, %c0_3] : memref<2x16xf32, #tpu.memory_space<vmem>>, vector<2x16xf32>
    %cst = arith.constant dense<0.000000e+00> : vector<2x256xf32>
    %3 = tpu.matmul %2, %1, %cst {dimension_numbers = #tpu.dot_dimension_numbers<[1], [0], [0], [1], [0, 0, 1, 1], [], []>} : vector<2x16xf32>, vector<16x256xf32>, vector<2x256xf32> -> vector<2x256xf32>
    %c0_4 = arith.constant 0 : index
    %c0_5 = arith.constant 0 : index
    %4 = vector.load %arg4[%c0_4, %c0_5] : memref<2x1xf32, #tpu.memory_space<vmem>>, vector<2x1xf32>
    %5 = vector.broadcast %4 : vector<2x1xf32> to vector<2x256xf32>
    %6 = arith.addf %3, %5 : vector<2x256xf32>
    %cst_6 = arith.constant 0.000000e+00 : f32
    %7 = vector.broadcast %cst_6 : f32 to vector<2x256xf32>
    %8 = arith.maximumf %6, %7 : vector<2x256xf32>
    %c0_7 = arith.constant 0 : index
    %c0_8 = arith.constant 0 : index
    %9 = vector.load %arg5[%c0_7, %c0_8] : memref<1x2xf32, #tpu.memory_space<vmem>>, vector<1x2xf32>
    %cst_9 = arith.constant dense<0.000000e+00> : vector<1x256xf32>
    %10 = tpu.matmul %9, %8, %cst_9 {dimension_numbers = #tpu.dot_dimension_numbers<[1], [0], [0], [1], [0, 0, 1, 1], [], []>} : vector<1x2xf32>, vector<2x256xf32>, vector<1x256xf32> -> vector<1x256xf32>
    %c0_10 = arith.constant 0 : index
    %c0_11 = arith.constant 0 : index
    %11 = vector.load %arg6[%c0_10, %c0_11] : memref<1x1xf32, #tpu.memory_space<vmem>>, vector<1x1xf32>
    %12 = vector.broadcast %11 : vector<1x1xf32> to vector<1x256xf32>
    %13 = arith.addf %10, %12 : vector<1x256xf32>
    %14 = arith.negf %13 : vector<1x256xf32>
    %15 = math.exp %14 : vector<1x256xf32>
    %cst_12 = arith.constant 1.000000e+00 : f32
    %16 = vector.broadcast %cst_12 : f32 to vector<1x256xf32>
    %17 = arith.addf %16, %15 : vector<1x256xf32>
    %18 = arith.divf %16, %17 : vector<1x256xf32>
    %19 = vector.broadcast %18 : vector<1x256xf32> to vector<16x256xf32>
    %20 = arith.mulf %1, %19 : vector<16x256xf32>
    %c0_13 = arith.constant 0 : index
    %c0_14 = arith.constant 0 : index
    %c0_15 = arith.constant 0 : index
    %21 = vector.load %arg7[%c0_13, %c0_14, %c0_15] : memref<1x16x256xf32, #tpu.memory_space<vmem>>, vector<1x16x256xf32>
    %22 = vector.shape_cast %21 : vector<1x16x256xf32> to vector<16x256xf32>
    %23 = vector.shape_cast %20 : vector<16x256xf32> to vector<1x16x256xf32>
    tpu.vector_store %arg7[%c0_13, %c0_14, %c0_15], %23 {strides = array<i32>} : memref<1x16x256xf32, #tpu.memory_space<vmem>>, vector<1x16x256xf32>,
    return
  }
  func.func @transform_0(%arg0: i32, %arg1: i32) -> (i32, i32, i32) {
    %c0_i32 = arith.constant 0 : i32
    %c0_i32_0 = arith.constant 0 : i32
    return %arg0, %c0_i32, %arg1 : i32, i32, i32
  }
  func.func @transform_1(%arg0: i32, %arg1: i32) -> (i32, i32) {
    %c0_i32 = arith.constant 0 : i32
    %c0_i32_0 = arith.constant 0 : i32
    %c0_i32_1 = arith.constant 0 : i32
    return %c0_i32, %c0_i32_0 : i32, i32
  }
  func.func @transform_2(%arg0: i32, %arg1: i32) -> (i32, i32) {
    %c0_i32 = arith.constant 0 : i32
    %c0_i32_0 = arith.constant 0 : i32
    %c0_i32_1 = arith.constant 0 : i32
    return %c0_i32, %c0_i32_0 : i32, i32
  }
  func.func @transform_3(%arg0: i32, %arg1: i32) -> (i32, i32) {
    %c0_i32 = arith.constant 0 : i32
    %c0_i32_0 = arith.constant 0 : i32
    %c0_i32_1 = arith.constant 0 : i32
    return %c0_i32, %c0_i32_0 : i32, i32
  }
  func.func @transform_4(%arg0: i32, %arg1: i32) -> (i32, i32) {
    %c0_i32 = arith.constant 0 : i32
    %c0_i32_0 = arith.constant 0 : i32
    %c0_i32_1 = arith.constant 0 : i32
    return %c0_i32, %c0_i32_0 : i32, i32
  }
  func.func @transform_5(%arg0: i32, %arg1: i32) -> (i32, i32, i32) {
    %c0_i32 = arith.constant 0 : i32
    %c0_i32_0 = arith.constant 0 : i32
    return %arg0, %c0_i32, %arg1 : i32, i32, i32
  }
}

</mosaic_0001>

<llo_original>
// kernel: tpu_custom_call.1
$region0: #{tpu_custom_call.1}
  #allocation0 [shape = 'u32[]', space=smem, size = 0x4, offset = 0x4, fixed_abs, tag = 'smem constant byte address 0x4 - core index']
  #allocation1 [shape = 'u32[144,128]{1,0:T(1,128)}', space=vmem, size = 0x12000, scoped, tag = 'internal scratch']
  #allocation2 [shape = 'f32[1,1]{1,0:T(1,128)S(1)}', space=vmem, size = 0x200, scoped, tag = 'scoped memory for tpu_custom_call.1']
  %s0 = inlined_call_operand.hbm [shape: f32[2,16,256], index: 0, kind: input, shape index: {}]
  %s1 = inlined_call_operand.vmem [shape: f32[2,16], index: 1, kind: input, shape index: {}]
  %s2 = inlined_call_operand.vmem [shape: f32[2,1], index: 2, kind: input, shape index: {}]
  %s3 = inlined_call_operand.vmem [shape: f32[1,2], index: 3, kind: input, shape index: {}]
  %s4 = inlined_call_operand.<no memory space> [shape: f32[1,1], index: 4, kind: input, shape index: {}]
  %s5 = inlined_call_operand.hbm [shape: f32[2,16,256], index: 5, kind: output, shape index: {}]
  %s6 = sld [smem:[#allocation0]]
  $region57: #{tpu_custom_call.1} parent=0
    _
  %s8 = ssub.s32 1, %s6
  %s9 = scalar_select 0, %s8, %s6
  %v10 = vstv %s4
  %11 = vst [vmem:[#allocation2] sm:$0x1] %v10
  $region1: #{tpu_custom_call.1} parent=0
    #allocation3 [shape = 'u8[32768]{0}', space=vmem, size = 0x8000, scoped, tag = 'input window, operand 0']
    #allocation4 [shape = 's32[2]{0}', space=sflag, size = 0x8, scoped, tag = 'scoped memory for tpu_custom_call.1']
    #allocation5 [shape = 's32[2]{0}', space=sflag, size = 0x8, scoped, tag = 'scoped memory for tpu_custom_call.1']
    #allocation6 [shape = 'u8[32768]{0}', space=vmem, size = 0x8000, scoped, tag = 'output window, operand 0']
    %12 = vsyncpa [#allocation4], 0
    %s13 = scalar_lea.sflag [#allocation4], 1
    %14 = vsyncpa %s13, 0
    %15 = vsyncpa [#allocation5], 0
    %s16 = scalar_lea.sflag [#allocation5], 1
    %17 = vsyncpa %s16, 0
    loop: start=0, step=1, limit=4
    $region2: #{tpu_custom_call.1} parent=1 // loop_pre_header
      _
    $region3: #{tpu_custom_call.1} parent=1 // loop_header
      %s19 = sphi 0, %s23
      %p20 = scmp.ge.s32.totalorder %s19, 4
      %s26 = sphi 0, %s38
      %s27 = sphi 0, %s34
      %s28 = sphi 0, %s26
      %s29 = sphi 0, %s27
      %s30 = sphi 0, %s28
      %s31 = sphi 0, %s29
      %s43 = sphi 0, %s45
      %s46 = sphi 0, %s43
      %s47 = sphi 0, %s46
      %s63 = sphi 0, %s47
      %s67 = sphi 0, %s67
      %s69 = sphi 0, %s67
      %s70 = sphi 0, %s69
      %s84 = sphi 0, %s70
      %s88 = sphi 0, %s88
      %s90 = sphi 0, %s88
      %s91 = sphi 0, %s90
      %s105 = sphi 0, %s91
      %s109 = sphi 0, %s109
      %s111 = sphi 0, %s109
      %s112 = sphi 0, %s111
      %s126 = sphi 0, %s112
      %s130 = sphi 0, %s130
      %s132 = sphi 0, %s130
      %s133 = sphi 0, %s132
      %s147 = sphi 0, %s133
      %s155 = sphi 0, %s157
      %s158 = sphi 0, %s155
      %s159 = sphi 0, %s158
      %s175 = sphi 0, %s159
    $region4: #{tpu_custom_call.1} parent=1 // loop_header_branch
      %22 = sbr.rel (%p20) target = $region8
    $region5: #{tpu_custom_call.1} parent=1 // loop_body
      %s24 = ssub.s32 %s19, 1
      %s25 = ssub.s32 %s19, 2
      %s32 = sadd.s32 1, %s27
      %p33 = scmp.ge.s32.totalorder %s32, 1
      %s34 = scalar_select %p33, 0, %s32
      %s35 = sadd.s32 1, %s26
      %s36 = scalar_select %p33, %s35, %s26
      %p37 = scmp.ge.s32.totalorder %s36, 2
      %s38 = scalar_select %p37, 0, %s36
      %s39 = ssub.s32 %s26, %s38
      %s40 = ssub.s32 %s27, %s34
      %s41 = sor.u32 %s39, %s40
      %p42 = scmp.eq.s32.totalorder %s41, 0
      %s44 = sadd.s32 %s43, 1
      %s45 = scalar_select %p42, %s43, %s44
      %p48 = pneg %p42
      %p49 = scmp.eq.s32.totalorder %s19, 1
      %p50 = por %p48, %p49
      %p51 = scmp.ne.s32.totalorder %s43, %s46
      %p52 = scmp.eq.s32.totalorder %s19, 0
      %p53 = por %p51, %p52
      %p54 = scmp.ne.s32.totalorder %s43, %s46
      %p55 = scmp.eq.s32.totalorder %s24, 1
      %p56 = por %p54, %p55
      %p57 = scmp.ne.s32.totalorder %s46, %s47
      %p58 = scmp.eq.s32.totalorder %s24, 0
      %p59 = por %p57, %p58
      %p60 = scmp.ne.s32.totalorder %s46, %s47
      %p61 = scmp.eq.s32.totalorder %s25, 1
      %p62 = por %p60, %p61
      %p64 = scmp.ne.s32.totalorder %s47, %s63
      %p65 = scmp.eq.s32.totalorder %s25, 0
      %p66 = por %p64, %p65
      %s68 = sadd.s32 %s67, 1
      %p71 = scmp.eq.s32.totalorder %s19, 1
      %p72 = scmp.ne.s32.totalorder %s67, %s69
      %p73 = scmp.eq.s32.totalorder %s19, 0
      %p74 = por %p72, %p73
      %p75 = scmp.ne.s32.totalorder %s67, %s69
      %p76 = scmp.eq.s32.totalorder %s24, 1
      %p77 = por %p75, %p76
      %p78 = scmp.ne.s32.totalorder %s69, %s70
      %p79 = scmp.eq.s32.totalorder %s24, 0
      %p80 = por %p78, %p79
      %p81 = scmp.ne.s32.totalorder %s69, %s70
      %p82 = scmp.eq.s32.totalorder %s25, 1
      %p83 = por %p81, %p82
      %p85 = scmp.ne.s32.totalorder %s70, %s84
      %p86 = scmp.eq.s32.totalorder %s25, 0
      %p87 = por %p85, %p86
      %s89 = sadd.s32 %s88, 1
      %p92 = scmp.eq.s32.totalorder %s19, 1
      %p93 = scmp.ne.s32.totalorder %s88, %s90
      %p94 = scmp.eq.s32.totalorder %s19, 0
      %p95 = por %p93, %p94
      %p96 = scmp.ne.s32.totalorder %s88, %s90
      %p97 = scmp.eq.s32.totalorder %s24, 1
      %p98 = por %p96, %p97
      %p99 = scmp.ne.s32.totalorder %s90, %s91
      %p100 = scmp.eq.s32.totalorder %s24, 0
      %p101 = por %p99, %p100
      %p102 = scmp.ne.s32.totalorder %s90, %s91
      %p103 = scmp.eq.s32.totalorder %s25, 1
      %p104 = por %p102, %p103
      %p106 = scmp.ne.s32.totalorder %s91, %s105
      %p107 = scmp.eq.s32.totalorder %s25, 0
      %p108 = por %p106, %p107
      %s110 = sadd.s32 %s109, 1
      %p113 = scmp.eq.s32.totalorder %s19, 1
      %p114 = scmp.ne.s32.totalorder %s109, %s111
      %p115 = scmp.eq.s32.totalorder %s19, 0
      %p116 = por %p114, %p115
      %p117 = scmp.ne.s32.totalorder %s109, %s111
      %p118 = scmp.eq.s32.totalorder %s24, 1
      %p119 = por %p117, %p118
      %p120 = scmp.ne.s32.totalorder %s111, %s112
      %p121 = scmp.eq.s32.totalorder %s24, 0
      %p122 = por %p120, %p121
      %p123 = scmp.ne.s32.totalorder %s111, %s112
      %p124 = scmp.eq.s32.totalorder %s25, 1
      %p125 = por %p123, %p124
      %p127 = scmp.ne.s32.totalorder %s112, %s126
      %p128 = scmp.eq.s32.totalorder %s25, 0
      %p129 = por %p127, %p128
      %s131 = sadd.s32 %s130, 1
      %p134 = scmp.eq.s32.totalorder %s19, 1
      %p135 = scmp.ne.s32.totalorder %s130, %s132
      %p136 = scmp.eq.s32.totalorder %s19, 0
      %p137 = por %p135, %p136
      %p138 = scmp.ne.s32.totalorder %s130, %s132
      %p139 = scmp.eq.s32.totalorder %s24, 1
      %p140 = por %p138, %p139
      %p141 = scmp.ne.s32.totalorder %s132, %s133
      %p142 = scmp.eq.s32.totalorder %s24, 0
      %p143 = por %p141, %p142
      %p144 = scmp.ne.s32.totalorder %s132, %s133
      %p145 = scmp.eq.s32.totalorder %s25, 1
      %p146 = por %p144, %p145
      %p148 = scmp.ne.s32.totalorder %s133, %s147
      %p149 = scmp.eq.s32.totalorder %s25, 0
      %p150 = por %p148, %p149
      %s151 = ssub.s32 %s26, %s38
      %s152 = ssub.s32 %s27, %s34
      %s153 = sor.u32 %s151, %s152
      %p154 = scmp.eq.s32.totalorder %s153, 0
      %s156 = sadd.s32 %s155, 1
      %s157 = scalar_select %p154, %s155, %s156
      %p160 = pneg %p154
      %p161 = scmp.eq.s32.totalorder %s19, 1
      %p162 = por %p160, %p161
      %p163 = scmp.ne.s32.totalorder %s155, %s158
      %p164 = scmp.eq.s32.totalorder %s19, 0
      %p165 = por %p163, %p164
      %p166 = scmp.ne.s32.totalorder %s155, %s158
      %p167 = scmp.eq.s32.totalorder %s24, 1
      %p168 = por %p166, %p167
      %p169 = scmp.ne.s32.totalorder %s158, %s159
      %p170 = scmp.eq.s32.totalorder %s24, 0
      %p171 = por %p169, %p170
      %p172 = scmp.ne.s32.totalorder %s158, %s159
      %p173 = scmp.eq.s32.totalorder %s25, 1
      %p174 = por %p172, %p173
      %p176 = scmp.ne.s32.totalorder %s159, %s175
      %p177 = scmp.eq.s32.totalorder %s25, 0
      %p178 = por %p176, %p177
      %p179 = scmp.le.s32.totalorder 1, %s19
      %p180 = scmp.lt.s32.totalorder %s19, 3
      %p181 = pnand %p179, %p180
      %p182 = pneg %p181
      // Predicated region
      $region9: #{tpu_custom_call.1} parent=5 // pred_check
        _
      $region10: #{tpu_custom_call.1} parent=5 // pred_check_branch
        %184 = sbr.rel (%p181) target = $region12
      $region11: #{tpu_custom_call.1} parent=5 // pred_region
        %s185 = ssub.s32 %s19, 1
        // Predicated region
        $region13: #{tpu_custom_call.1} parent=11 // pred_check
          %p186 = pneg %p80
        $region14: #{tpu_custom_call.1} parent=11 // pred_check_branch
          %188 = sbr.rel (%p186) target = $region16
        $region15: #{tpu_custom_call.1} parent=11 // pred_region
          _
        $region16: #{tpu_custom_call.1} parent=11 // pred_fallthru
          _
        // Predicated region
        $region17: #{tpu_custom_call.1} parent=11 // pred_check
          %p189 = pneg %p101
        $region18: #{tpu_custom_call.1} parent=11 // pred_check_branch
          %191 = sbr.rel (%p189) target = $region20
        $region19: #{tpu_custom_call.1} parent=11 // pred_region
          _
        $region20: #{tpu_custom_call.1} parent=11 // pred_fallthru
          _
        // Predicated region
        $region21: #{tpu_custom_call.1} parent=11 // pred_check
          %p192 = pneg %p122
        $region22: #{tpu_custom_call.1} parent=11 // pred_check_branch
          %194 = sbr.rel (%p192) target = $region24
        $region23: #{tpu_custom_call.1} parent=11 // pred_region
          _
        $region24: #{tpu_custom_call.1} parent=11 // pred_fallthru
          _
        // Predicated region
        $region25: #{tpu_custom_call.1} parent=11 // pred_check
          %p195 = pneg %p143
        $region26: #{tpu_custom_call.1} parent=11 // pred_check_branch
          %197 = sbr.rel (%p195) target = $region28
        $region27: #{tpu_custom_call.1} parent=11 // pred_region
          _
        $region28: #{tpu_custom_call.1} parent=11 // pred_fallthru
          _
      $region12: #{tpu_custom_call.1} parent=5 // pred_fallthru
        _
      %p198 = scmp.lt.s32.totalorder %s19, 2
      // Predicated region
      $region29: #{tpu_custom_call.1} parent=5 // pred_check
        %p199 = pneg %p198
      $region30: #{tpu_custom_call.1} parent=5 // pred_check_branch
        %201 = sbr.rel (%p199) target = $region32
      $region31: #{tpu_custom_call.1} parent=5 // pred_region
        // Predicated region
        $region33: #{tpu_custom_call.1} parent=31 // pred_check
          %p202 = pneg %p53
        $region34: #{tpu_custom_call.1} parent=31 // pred_check_branch
          %204 = sbr.rel (%p202) target = $region36
        $region35: #{tpu_custom_call.1} parent=31 // pred_region
          %s205 = sand.u32 %s43, 1
          %s206 = scalar_lea.sflag [#allocation4], %s205
          %s207 = sand.u32 %s43, 1
          %s208 = smul.addr %s207, 32
          %s209 = scalar_lea.vmem [#allocation3], %s208
          %s210 = smul.u32 2, %s27
          %s212 = ssub.s32 512, 512
          %213 = vsyncadd %s206, %s212
          %s214 = smul.addr %s26, 4
          %s215 = sadd.s32 %s210, %s214
          %s216 = smul.addr %s215, 128
          %s217 = scalar_lea.hbm %s0, %s216
          %s218 = sshll.u32 %s209, 4
          %s219 = int_to_ptr.vmem [resolvable:$true] %s218
          %224 = dma.hbm_to_vmem [thread:$0]  %s217, 512, %s219, %s206, 256, 256, 16
        $region36: #{tpu_custom_call.1} parent=31 // pred_fallthru
          _
      $region32: #{tpu_custom_call.1} parent=5 // pred_fallthru
        _
      %p225 = scmp.le.s32.totalorder 1, %s19
      %p226 = scmp.lt.s32.totalorder %s19, 3
      %p227 = pnand %p225, %p226
      %p228 = pneg %p227
      // Predicated region
      $region37: #{tpu_custom_call.1} parent=5 // pred_check
        _
      $region38: #{tpu_custom_call.1} parent=5 // pred_check_branch
        %230 = sbr.rel (%p227) target = $region40
      $region39: #{tpu_custom_call.1} parent=5 // pred_region
        %s231 = ssub.s32 %s19, 1
        %s232 = sand.u32 %s46, 1
        %s233 = scalar_lea.sflag [#allocation4], %s232
        %s234 = sand.u32 %s46, 1
        %s235 = smul.addr %s234, 32
        %s236 = scalar_lea.vmem [#allocation3], %s235
        // Predicated region
        $region41: #{tpu_custom_call.1} parent=39 // pred_check
          %p237 = pneg %p59
        $region42: #{tpu_custom_call.1} parent=39 // pred_check_branch
          %239 = sbr.rel (%p237) target = $region44
        $region43: #{tpu_custom_call.1} parent=39 // pred_region
          %240 = dma.done %s233, 512
        $region44: #{tpu_custom_call.1} parent=39 // pred_fallthru
          _
        %s241 = sand.u32 %s46, 1
        %s242 = scalar_lea.sflag [#allocation4], %s241
        %s243 = sand.u32 %s46, 1
        %s244 = smul.addr %s243, 32
        %s245 = scalar_lea.vmem [#allocation3], %s244
        %p246 = pneg %p59
        %p247 = pneg %p56
        %p248 = pneg %p80
        %p249 = pneg %p77
        %p250 = pneg %p101
        %p251 = pneg %p98
        %p252 = pneg %p122
        %p253 = pneg %p119
        %p254 = pneg %p143
        %p255 = pneg %p140
        %p256 = pneg %p171
        %p257 = pneg %p168
        %s258 = sand.u32 %s158, 1
        %s259 = scalar_lea.sflag [#allocation5], %s258
        %s260 = sand.u32 %s158, 1
        %s261 = smul.addr %s260, 32
        %s262 = scalar_lea.vmem [#allocation6], %s261
        %s263 = smul.u32 2, %s29
        %s264 = smul.u32 2, %s29
        %v265 = vld [vmem:[%s236] sm:$0xff]
        %v266 = vld [vmem:[%s236 + $0x8] sm:$0xff]
        %v267 = vld [vmem:[%s236 + $0x10] sm:$0xff]
        %v268 = vld [vmem:[%s236 + $0x18] sm:$0xff]
        %v269 = vld [vmem:[%s1] sm:$0x3]
        %v270 = vld [vmem:[%s2] sm:$0x3]
        %272 = vset.pattern.permute.xlu0 0
        %273 = vperm.xlu0 %272, %v270
        %v274 = vpop.permute.xlu0 %273
        %vm276 = vcmask 130048
        %v278 = vsel %vm276, %v269, 0
        %280 = vmatprep.subr.mxu0 %v266
        %281 = vmatpush1.msra.mxu0 %v265
        %282 = vmatprep.subr.mxu0 %v268
        %283 = vmatpush1.msra.mxu0 %v267
        %284 = vmatprep.subr.mxu0 0.0
        %285 = vmatpush1.msra.mxu0 0.0
        %286 = vmatprep.subr.mxu0 0.0
        %287 = vmatpush1.msra.mxu0 0.0
        %288 = vmatprep.subr.mxu0 0.0
        %289 = vmatpush1.msra.mxu0 0.0
        %290 = vmatprep.subr.mxu0 0.0
        %291 = vmatpush1.msra.mxu0 0.0
        %292 = vmatprep.subr.mxu0 0.0
        %293 = vmatpush1.msra.mxu0 0.0
        %294 = vmatprep.subr.mxu0 0.0
        %295 = vmatpush1.msra.mxu0 0.0
        %296 = vmatprep.subr.mxu0 0.0
        %297 = vmatpush1.msra.mxu0 0.0
        %298 = vmatprep.subr.mxu0 0.0
        %299 = vmatpush1.msra.mxu0 0.0
        %300 = vmatprep.subr.mxu0 0.0
        %301 = vmatpush1.msra.mxu0 0.0
        %302 = vmatprep.subr.mxu0 0.0
        %303 = vmatpush1.msra.mxu0 0.0
        %304 = vmatprep.subr.mxu0 0.0
        %305 = vmatpush1.msra.mxu0 0.0
        %306 = vmatprep.subr.mxu0 0.0
        %307 = vmatpush1.msra.mxu0 0.0
        %308 = vmatprep.subr.mxu0 0.0
        %309 = vmatpush1.msra.mxu0 0.0
        %310 = vmatprep.subr.mxu0 0.0
        %311 = vmatpush1.msra.mxu0 0.0
        %312 = vmatprep.subr.mxu0 0.0
        %313 = vmatpush1.msra.mxu0 0.0
        %314 = vmatprep.subr.mxu0 0.0
        %315 = vmatpush1.msra.mxu0 0.0
        %316 = vmatprep.subr.mxu0 0.0
        %317 = vmatpush1.msra.mxu0 0.0
        %318 = vmatprep.subr.mxu0 0.0
        %319 = vmatpush1.msra.mxu0 0.0
        %320 = vmatprep.subr.mxu0 0.0
        %321 = vmatpush1.msra.mxu0 0.0
        %322 = vmatprep.subr.mxu0 0.0
        %323 = vmatpush1.msra.mxu0 0.0
        %324 = vmatprep.subr.mxu0 0.0
        %325 = vmatpush1.msra.mxu0 0.0
        %326 = vmatprep.subr.mxu0 0.0
        %327 = vmatpush1.msra.mxu0 0.0
        %328 = vmatprep.subr.mxu0 0.0
        %329 = vmatpush1.msra.mxu0 0.0
        %330 = vmatprep.subr.mxu0 0.0
        %331 = vmatpush1.msra.mxu0 0.0
        %332 = vmatprep.subr.mxu0 0.0
        %333 = vmatpush1.msra.mxu0 0.0
        %334 = vmatprep.subr.mxu0 0.0
        %335 = vmatpush1.msra.mxu0 0.0
        %336 = vmatprep.subr.mxu0 0.0
        %337 = vmatpush1.msra.mxu0 0.0
        %338 = vmatprep.subr.mxu0 0.0
        %339 = vmatpush1.msra.mxu0 0.0
        %340 = vmatprep.subr.mxu0 0.0
        %341 = vmatpush1.msra.mxu0 0.0
        %342 = vmatprep.subr.mxu0 0.0
        %343 = vmatpush1.msra.mxu0 0.0
        %344 = vmatprep.mubr.f32.mxu0 0.0
        %345 = vmatmul.mubr.f32.gmra.mrb[0].mxu0 %v278
        %v346 = vpop.f32.mrb[0].mxu0
        %v347 = vadd.f32 %v274, %v346
        %v348 = vpop.f32.mrb[0].mxu0
        %v349 = vadd.f32 %v274, %v348
        %350 = vdwg.mxu0
        %v351 = vmax.f32 %v347, 0.0
        %v352 = vmax.f32 %v349, 0.0
        %v353 = vld [vmem:[%s3] sm:$0x1]
        %v354 = vld [vmem:[#allocation2] sm:$0x1]
        %356 = vset.pattern.permute.xlu0 0
        %357 = vperm.xlu0 %356, %v354
        %v358 = vpop.permute.xlu0 %357
        %v360 = vlaneseq
        %v361 = vshrl.u32 %v360, 7
        %v362 = vsub.s32 0, %v361
        %v363 = vrot.slane %v358, %v362
        %vm364 = vcmask 15360
        %v366 = vsel %vm364, %v353, 0
        %vm368 = vcmask 1041408
        %v370 = vsel %vm368, %v351, 0
        %v373 = vsel %vm368, %v352, 0
        %375 = vmatprep.subr.mxu0 %v373
        %376 = vmatpush1.msra.mxu0 %v370
        %377 = vmatprep.subr.mxu0 0.0
        %378 = vmatpush1.msra.mxu0 0.0
        %379 = vmatprep.subr.mxu0 0.0
        %380 = vmatpush1.msra.mxu0 0.0
        %381 = vmatprep.subr.mxu0 0.0
        %382 = vmatpush1.msra.mxu0 0.0
        %383 = vmatprep.subr.mxu0 0.0
        %384 = vmatpush1.msra.mxu0 0.0
        %385 = vmatprep.subr.mxu0 0.0
        %386 = vmatpush1.msra.mxu0 0.0
        %387 = vmatprep.subr.mxu0 0.0
        %388 = vmatpush1.msra.mxu0 0.0
        %389 = vmatprep.subr.mxu0 0.0
        %390 = vmatpush1.msra.mxu0 0.0
        %391 = vmatprep.subr.mxu0 0.0
        %392 = vmatpush1.msra.mxu0 0.0
        %393 = vmatprep.subr.mxu0 0.0
        %394 = vmatpush1.msra.mxu0 0.0
        %395 = vmatprep.subr.mxu0 0.0
        %396 = vmatpush1.msra.mxu0 0.0
        %397 = vmatprep.subr.mxu0 0.0
        %398 = vmatpush1.msra.mxu0 0.0
        %399 = vmatprep.subr.mxu0 0.0
        %400 = vmatpush1.msra.mxu0 0.0
        %401 = vmatprep.subr.mxu0 0.0
        %402 = vmatpush1.msra.mxu0 0.0
        %403 = vmatprep.subr.mxu0 0.0
        %404 = vmatpush1.msra.mxu0 0.0
        %405 = vmatprep.subr.mxu0 0.0
        %406 = vmatpush1.msra.mxu0 0.0
        %407 = vmatprep.subr.mxu0 0.0
        %408 = vmatpush1.msra.mxu0 0.0
        %409 = vmatprep.subr.mxu0 0.0
        %410 = vmatpush1.msra.mxu0 0.0
        %411 = vmatprep.subr.mxu0 0.0
        %412 = vmatpush1.msra.mxu0 0.0
        %413 = vmatprep.subr.mxu0 0.0
        %414 = vmatpush1.msra.mxu0 0.0
        %415 = vmatprep.subr.mxu0 0.0
        %416 = vmatpush1.msra.mxu0 0.0
        %417 = vmatprep.subr.mxu0 0.0
        %418 = vmatpush1.msra.mxu0 0.0
        %419 = vmatprep.subr.mxu0 0.0
        %420 = vmatpush1.msra.mxu0 0.0
        %421 = vmatprep.subr.mxu0 0.0
        %422 = vmatpush1.msra.mxu0 0.0
        %423 = vmatprep.subr.mxu0 0.0
        %424 = vmatpush1.msra.mxu0 0.0
        %425 = vmatprep.subr.mxu0 0.0
        %426 = vmatpush1.msra.mxu0 0.0
        %427 = vmatprep.subr.mxu0 0.0
        %428 = vmatpush1.msra.mxu0 0.0
        %429 = vmatprep.subr.mxu0 0.0
        %430 = vmatpush1.msra.mxu0 0.0
        %431 = vmatprep.subr.mxu0 0.0
        %432 = vmatpush1.msra.mxu0 0.0
        %433 = vmatprep.subr.mxu0 0.0
        %434 = vmatpush1.msra.mxu0 0.0
        %435 = vmatprep.subr.mxu0 0.0
        %436 = vmatpush1.msra.mxu0 0.0
        %437 = vmatprep.subr.mxu0 0.0
        %438 = vmatpush1.msra.mxu0 0.0
        %439 = vmatprep.mubr.f32.mxu0 0.0
        %440 = vmatmul.mubr.f32.gmra.mrb[0].mxu0 %v366
        %v441 = vpop.f32.mrb[0].mxu0
        %v442 = vadd.f32 %v363, %v441
        %v443 = vpop.f32.mrb[0].mxu0
        %v444 = vadd.f32 %v363, %v443
        %445 = vdwg.mxu0
        %v446 = vxor.u32 %v442, 2147483648
        %v447 = vxor.u32 %v444, 2147483648
        %v448 = vmul.f32 %v446, 1.442695
        %v449 = vpow.pop %v448
        %v450 = vmul.f32 %v447, 1.442695
        %v451 = vpow.pop %v450
        %v452 = vadd.f32 %v449, 1.0
        %v453 = vadd.f32 %v451, 1.0
        %v454 = vrcp.pop %v452
        %v455 = vmul.f32 1.0, %v454
        %v456 = vrcp.pop %v453
        %v457 = vmul.f32 1.0, %v456
        %v458 = vlaneseq
        %v459 = vshrl.u32 %v458, 7
        %v460 = vsub.s32 0, %v459
        %v461 = vrot.slane %v455, %v460
        %v462 = vlaneseq
        %v463 = vshrl.u32 %v462, 7
        %v464 = vsub.s32 0, %v463
        %v465 = vrot.slane %v457, %v464
        %v466 = vmul.f32 %v265, %v461
        %v467 = vmul.f32 %v266, %v465
        %v468 = vmul.f32 %v267, %v461
        %v469 = vmul.f32 %v268, %v465
        %470 = vst [vmem:[%s262] sm:$0xff] %v466
        %471 = vst [vmem:[%s262 + $0x8] sm:$0xff] %v467
        %472 = vst [vmem:[%s262 + $0x10] sm:$0xff] %v468
        %473 = vst [vmem:[%s262 + $0x18] sm:$0xff] %v469
        %s474 = sand.u32 %s158, 1
        %s475 = scalar_lea.sflag [#allocation5], %s474
        %s476 = sand.u32 %s158, 1
        %s477 = smul.addr %s476, 32
        %s478 = scalar_lea.vmem [#allocation6], %s477
        // Predicated region
        $region45: #{tpu_custom_call.1} parent=39 // pred_check
          %p479 = pneg %p168
        $region46: #{tpu_custom_call.1} parent=39 // pred_check_branch
          %481 = sbr.rel (%p479) target = $region48
        $region47: #{tpu_custom_call.1} parent=39 // pred_region
          %s482 = smul.u32 2, %s29
          %s484 = ssub.s32 512, 512
          %485 = vsyncadd %s475, %s484
          %s486 = smul.addr %s28, 4
          %s487 = sadd.s32 %s482, %s486
          %s488 = smul.addr %s487, 128
          %s489 = scalar_lea.hbm %s5, %s488
          %s490 = sshll.u32 %s478, 4
          %s491 = int_to_ptr.vmem [resolvable:$true] %s490
          %496 = dma.vmem_to_hbm [thread:$0]  %s491, 512, %s489, %s475, 256, 256, 16
        $region48: #{tpu_custom_call.1} parent=39 // pred_fallthru
          _
      $region40: #{tpu_custom_call.1} parent=5 // pred_fallthru
        _
      %p497 = scmp.le.s32.totalorder 2, %s19
      // Predicated region
      $region49: #{tpu_custom_call.1} parent=5 // pred_check
        %p498 = pneg %p497
      $region50: #{tpu_custom_call.1} parent=5 // pred_check_branch
        %500 = sbr.rel (%p498) target = $region52
      $region51: #{tpu_custom_call.1} parent=5 // pred_region
        %s501 = ssub.s32 %s19, 2
        // Predicated region
        $region53: #{tpu_custom_call.1} parent=51 // pred_check
          %p502 = pneg %p174
        $region54: #{tpu_custom_call.1} parent=51 // pred_check_branch
          %504 = sbr.rel (%p502) target = $region56
        $region55: #{tpu_custom_call.1} parent=51 // pred_region
          %s505 = sand.u32 %s159, 1
          %s506 = scalar_lea.sflag [#allocation5], %s505
          %s507 = sand.u32 %s159, 1
          %s508 = smul.addr %s507, 32
          %s509 = scalar_lea.vmem [#allocation6], %s508
          %510 = dma.done %s506, 512
        $region56: #{tpu_custom_call.1} parent=51 // pred_fallthru
          _
      $region52: #{tpu_custom_call.1} parent=5 // pred_fallthru
        _
    $region6: #{tpu_custom_call.1} parent=1 // loop_footer
      %s23 = sadd.s32 1, %s19
    $region7: #{tpu_custom_call.1} parent=1 // loop_footer_branch
      %18 = sbr.rel target = $region3
    $region8: #{tpu_custom_call.1} parent=1 // loop_exit
      _
    %511 = vsyncpa [#allocation4], 1
    %s512 = scalar_lea.sflag [#allocation4], 1
    %513 = vsyncpa %s512, 1
    %514 = vsyncpa [#allocation5], 1
    %s515 = scalar_lea.sflag [#allocation5], 1
    %516 = vsyncpa %s515, 1

</llo_original>
